<compile_context>
chip_gen: v7x
topology: tpu7x:2x2x1
jax: 0.10.0
libtpu: 0.0.40
codegen_flags: <defaults>
</compile_context>

<pallas_src>
import functools

import jax
import jax.numpy as jnp
from jax import lax
from jax.experimental import pallas as pl
from jax.experimental.pallas import tpu as pltpu


def _dice_stats_kernel(x_ref, t_ref, out_ref, acc_i, acc_y, acc_z, *,
                       apply_softmax, mask_rows, rows_valid, tiles_per_split):
    """Accumulates per-class (intersect, y_sum, z_sum) over row tiles.

    x_ref: (C, R, L) scores          t_ref: (1, R, L) integer labels
    out_ref: (C, 3) per-(image, split) stats
    acc_*:  (C, acc_rows, L) lane/sublane-dense f32 accumulators.
    """
    s = pl.program_id(1)
    j = pl.program_id(2)

    @pl.when(j == 0)
    def _():
        acc_i[...] = jnp.zeros_like(acc_i)
        acc_y[...] = jnp.zeros_like(acc_y)
        acc_z[...] = jnp.zeros_like(acc_z)

    x = x_ref[...].astype(jnp.float32)          # (C, R, L) — cast per tile
    labels = t_ref[...].astype(jnp.int32)       # (1, R, L) — cast in VMEM
    c, r_tile, lanes = x.shape
    acc_rows = acc_i.shape[1]
    fold_n = r_tile // acc_rows

    if apply_softmax:
        # Per-(row, lane) softmax over the class slabs: elementwise across C,
        # no XLU traffic.  Reciprocal of the (1, R, L) denominator rides the
        # EUP slot; the multiply rides spare VALU slots.
        m = jnp.max(x, axis=0, keepdims=True)
        e = jnp.exp(x - m)
        denom = jnp.sum(e, axis=0, keepdims=True)
        x = e * pl.reciprocal(denom, approx=True)

    if mask_rows:
        # Tail tile(s): zero out-of-bounds rows (NaN/Inf-safe against garbage).
        tile_idx = s * tiles_per_split + j
        row = lax.broadcasted_iota(jnp.int32, (1, r_tile, 1), 1) + tile_idx * r_tile
        valid = row < rows_valid                # (1, R, 1) bool
        x = jnp.where(valid, x, 0.0)

    class_ids = lax.broadcasted_iota(jnp.int32, (c, 1, 1), 0)
    match = labels == class_ids                 # (C, R, L) one-hot mask

    def fold(v):
        # (C, R, L) -> (C, acc_rows, L) with pure VPU adds.  The reshape is a
        # free vreg-aligned relabel since acc_rows (=8) divides r_tile.
        if fold_n == 1:
            return v
        return jnp.sum(v.reshape(c, fold_n, acc_rows, lanes), axis=1)

    onehot = jnp.where(match, 1.0, 0.0)
    if mask_rows:
        onehot = jnp.where(valid, onehot, 0.0)

    # x is already zeroed on invalid rows, so `inter` / `z` need no extra gate.
    acc_i[...] += fold(jnp.where(match, x, 0.0))
    acc_y[...] += fold(onehot)                  # one-hot is binary: y == y*y
    acc_z[...] += fold(x * x)

    @pl.when(j == pl.num_programs(2) - 1)
    def _():
        # Epilogue: the only lane (XLU) / sublane reductions in the kernel,
        # executed once per (image, split).
        out_ref[:, 0:1] = jnp.sum(jnp.sum(acc_i[...], axis=2), axis=1, keepdims=True)
        out_ref[:, 1:2] = jnp.sum(jnp.sum(acc_y[...], axis=2), axis=1, keepdims=True)
        out_ref[:, 2:3] = jnp.sum(jnp.sum(acc_z[...], axis=2), axis=1, keepdims=True)


def _block_budget():
    """(target block bytes, scoped vmem limit) for the local chip generation."""
    try:
        cap = int(getattr(pltpu.get_tpu_info(), "vmem_capacity_bytes", 0) or 0)
    except Exception:
        cap = 0
    if cap >= 96 * 1024 * 1024:        # v5e / v6e: 128 MiB physical VMEM
        return 8 * 1024 * 1024, 64 * 1024 * 1024
    # v7x (64 MiB VMEM) or unknown chip: conservative sizes that fit everywhere.
    return 4 * 1024 * 1024, 32 * 1024 * 1024


def _choose_lanes(hw):
    if hw % 128 == 0:
        return 128
    # Keep rows > 1 (pipelined blocks): largest divisor of HW in [128, 4096].
    best = 1
    d = 1
    while d * d <= hw:
        if hw % d == 0:
            for cand in (d, hw // d):
                if 128 <= cand <= 4096:
                    best = max(best, cand)
        d += 1
    if best >= 128:
        return best
    # TODO(synk): prime-ish HW falls back to one full-width block per image; a
    # lane-masked tiled variant would be needed for very large such images.
    return hw


def _choose_row_tile(rows, c, lanes, itemsize, sublane_mult, block_bytes):
    bytes_per_row = c * lanes * itemsize
    r_cap = max(sublane_mult,
                (block_bytes // bytes_per_row) // sublane_mult * sublane_mult)
    if rows <= r_cap:
        return rows, False               # full extent, no mask needed
    # Prefer an exact divisor of `rows`: no tile pays the tail mask.
    cand = r_cap
    while cand >= sublane_mult:
        if rows % cand == 0:
            return cand, False
        cand -= sublane_mult
    return r_cap, True                   # no divisor: mask the tail tile(s)


def dice_loss(inputs, target, n_classes, *, ignore_index=None, weight=None,
              softmax=False, max_block_bytes=None):
    """JAX/Pallas equivalent of DiceLoss.forward.

    inputs: (N, C, H, W) float scores (probabilities, or logits if softmax=True)
    target: (N, H, W) integer class labels (any integer dtype; never upcast
            on the host side — the compare happens in-kernel)
    """
    n, c, h, w = inputs.shape
    assert c == n_classes, "channel dim must equal n_classes"
    hw = h * w

    target_bytes, vmem_limit = _block_budget()
    if max_block_bytes is not None:
        target_bytes = max_block_bytes

    lanes = _choose_lanes(hw)
    rows = hw // lanes

    sublane_mult = max(8, 32 // inputs.dtype.itemsize,
                       32 // jnp.dtype(target.dtype).itemsize)
    r_tile, mask_rows = _choose_row_tile(rows, c, lanes, inputs.dtype.itemsize,
                                         sublane_mult, target_bytes)
    grid_j = pl.cdiv(rows, r_tile)
    acc_rows = 8 if r_tile % 8 == 0 else r_tile

    # Second TC on v7x: with an odd batch count the batch axis alone cannot be
    # split evenly across cores, so split the row-tile range into two parallel
    # halves instead.  The axis has size 1 otherwise (no-op on v5e/v6e).
    n_split = 2 if (n % 2 == 1 and grid_j % 2 == 0 and grid_j >= 2) else 1
    tiles_per_split = grid_j // n_split

    # Free, row-major reshapes: no transpose, no pad, no dtype upcast.
    x = inputs.reshape(n, c, rows, lanes)
    t = target.reshape(n, 1, rows, lanes)

    kernel = functools.partial(_dice_stats_kernel, apply_softmax=softmax,
                               mask_rows=mask_rows, rows_valid=rows,
                               tiles_per_split=tiles_per_split)

    stats = pl.pallas_call(
        kernel,
        out_shape=jax.ShapeDtypeStruct((n, n_split, c, 3), jnp.float32),
        grid_spec=pltpu.PrefetchScalarGridSpec(
            num_scalar_prefetch=0,
            grid=(n, n_split, tiles_per_split),
            in_specs=[
                pl.BlockSpec((None, c, r_tile, lanes),
                             lambda i, s, j: (i, 0, s * tiles_per_split + j, 0)),
                pl.BlockSpec((None, 1, r_tile, lanes),
                             lambda i, s, j: (i, 0, s * tiles_per_split + j, 0)),
            ],
            out_specs=pl.BlockSpec((None, None, c, 3),
                                   lambda i, s, j: (i, s, 0, 0)),
            scratch_shapes=[pltpu.VMEM((c, acc_rows, lanes), jnp.float32)] * 3,
        ),
        compiler_params=pltpu.CompilerParams(
            # Batch and split axes shard across cores; row-tile axis is the
            # sequential accumulation axis.
            dimension_semantics=("parallel", "parallel", "arbitrary"),
            vmem_limit_bytes=vmem_limit),
    )(x, t)

    # Combine per-(image, split) partials; the rest is a few scalars per class.
    stats = jnp.sum(stats, axis=(0, 1))        # (C, 3)
    intersect, y_sum, z_sum = stats[:, 0], stats[:, 1], stats[:, 2]

    smooth = 1e-05
    dice = 1.0 - (2.0 * intersect + smooth) / (z_sum + y_sum + smooth)

    if weight is None:
        weight_arr = jnp.ones((n_classes,), jnp.float32)
    else:
        weight_arr = jnp.asarray(weight, jnp.float32)

    keep = jnp.ones((n_classes,), jnp.float32)
    if ignore_index is not None:
        keep = keep.at[ignore_index].set(0.0)

    # Matches torch: sum_i dice_i * weight_i (skipping ignore_index) / n_classes.
    return jnp.sum(dice * weight_arr * keep) / n_classes


def _dice_loss_reference(inputs, target, n_classes, *, ignore_index=None,
                         weight=None, softmax=False):
    x = inputs.astype(jnp.float32)
    if softmax:
        x = jax.nn.softmax(x, axis=1)
    onehot = jax.nn.one_hot(target, n_classes, axis=1, dtype=jnp.float32)
    smooth = 1e-05
    inter = jnp.sum(x * onehot, axis=(0, 2, 3))
    y = jnp.sum(onehot, axis=(0, 2, 3))
    z = jnp.sum(x * x, axis=(0, 2, 3))
    dice = 1.0 - (2.0 * inter + smooth) / (z + y + smooth)
    w = (jnp.ones((n_classes,), jnp.float32) if weight is None
         else jnp.asarray(weight, jnp.float32))
    keep = jnp.ones((n_classes,), jnp.float32)
    if ignore_index is not None:
        keep = keep.at[ignore_index].set(0.0)
    return jnp.sum(dice * w * keep) / n_classes


if __name__ == "__main__":
    key = jax.random.PRNGKey(0)
    k1, k2, k3, k4, k5, k6 = jax.random.split(key, 6)

    # 1) Module-sized case: inputs already probabilities (torch default path).
    N, C, H, W = 2, 4, 16, 16
    logits = jax.random.normal(k1, (N, C, H, W), dtype=jnp.float32)
    probs = jax.nn.softmax(logits, axis=1)
    target = jax.random.randint(k2, (N, H, W), 0, C, dtype=jnp.int32)

    loss = jax.block_until_ready(dice_loss(probs, target, n_classes=C))
    ref = _dice_loss_reference(probs, target, C)
    assert jnp.allclose(loss, ref, rtol=1e-4, atol=1e-5), (loss, ref)

    # 2) In-kernel softmax + per-class weights + ignore_index.
    #    (approx reciprocal in the softmax denominator -> slightly looser tol)
    wts = [1.0, 2.0, 0.5, 1.0]
    loss_sm = jax.block_until_ready(
        dice_loss(logits, target, n_classes=C, softmax=True,
                  weight=wts, ignore_index=0))
    ref_sm = _dice_loss_reference(logits, target, C, softmax=True,
                                  weight=wts, ignore_index=0)
    assert jnp.allclose(loss_sm, ref_sm, rtol=5e-3, atol=1e-4), (loss_sm, ref_sm)

    # 3) Multi-tile accumulation + split row axis (odd N), forced small blocks.
    N2, C2, H2, W2 = 1, 4, 128, 128
    logits2 = jax.random.normal(k3, (N2, C2, H2, W2), dtype=jnp.float32)
    probs2 = jax.nn.softmax(logits2, axis=1)
    target2 = jax.random.randint(k4, (N2, H2, W2), 0, C2, dtype=jnp.int32)
    loss2 = jax.block_until_ready(
        dice_loss(probs2, target2, n_classes=C2, max_block_bytes=32 * 1024))
    ref2 = _dice_loss_reference(probs2, target2, C2)
    assert jnp.allclose(loss2, ref2, rtol=1e-4, atol=1e-5), (loss2, ref2)

    # 4) Masked-tail path (rows not divisible by any valid row tile).
    N3, C3, H3, W3 = 2, 4, 48, 48
    logits3 = jax.random.normal(k5, (N3, C3, H3, W3), dtype=jnp.float32)
    probs3 = jax.nn.softmax(logits3, axis=1)
    target3 = jax.random.randint(k6, (N3, H3, W3), 0, C3, dtype=jnp.int32)
    loss3 = jax.block_until_ready(
        dice_loss(probs3, target3, n_classes=C3, max_block_bytes=8 * 1024))
    ref3 = _dice_loss_reference(probs3, target3, C3)
    assert jnp.allclose(loss3, ref3, rtol=1e-4, atol=1e-5), (loss3, ref3)

    print("KERNEL_OK")
</pallas_src>

<mosaic_0001>
module attributes {stable_mosaic.version = 11 : i64} {
  func.func @_dice_stats_kernel(%arg0: i32, %arg1: i32, %arg2: i32, %arg3: memref<1x4x2x128xf32, #tpu.memory_space<vmem>>, %arg4: memref<1x1x2x128xi32, #tpu.memory_space<vmem>>, %arg5: memref<1x1x4x3xf32, #tpu.memory_space<vmem>>, %arg6: memref<4x2x128xf32, #tpu.memory_space<vmem>>, %arg7: memref<4x2x128xf32, #tpu.memory_space<vmem>>, %arg8: memref<4x2x128xf32, #tpu.memory_space<vmem>>) attributes {dimension_semantics = [#tpu.dimension_semantics<parallel>, #tpu.dimension_semantics<parallel>, #tpu.dimension_semantics<arbitrary>], iteration_bounds = array<i64: 2, 1, 1>, scalar_prefetch = 0 : i64, scratch_operands = 3 : i64, tpu.core_type = #tpu.core_type<tc>, window_params = [{transform_indices = @transform_0, window_bounds = array<i64: 1, 4, 2, 128>}, {transform_indices = @transform_1, window_bounds = array<i64: 1, 1, 2, 128>}, {transform_indices = @transform_2, window_bounds = array<i64: 1, 1, 4, 3>}]} {
    %c0_i32 = arith.constant 0 : i32
    %0 = arith.cmpi eq, %arg2, %c0_i32 : i32
    %1 = arith.extui %0 : i1 to i32
    %c0_i32_0 = arith.constant 0 : i32
    %2 = arith.cmpi ne, %1, %c0_i32_0 : i32
    scf.if %2 {
      %cst_30 = arith.constant 0.000000e+00 : f32
      %29 = vector.broadcast %cst_30 : f32 to vector<4x2x128xf32>
      %c0_31 = arith.constant 0 : index
      %c0_32 = arith.constant 0 : index
      %c0_33 = arith.constant 0 : index
      %30 = vector.load %arg6[%c0_31, %c0_32, %c0_33] : memref<4x2x128xf32, #tpu.memory_space<vmem>>, vector<4x2x128xf32>
      tpu.vector_store %arg6[%c0_31, %c0_32, %c0_33], %29 {strides = array<i32>} : memref<4x2x128xf32, #tpu.memory_space<vmem>>, vector<4x2x128xf32>,
      %cst_34 = arith.constant 0.000000e+00 : f32
      %31 = vector.broadcast %cst_34 : f32 to vector<4x2x128xf32>
      %c0_35 = arith.constant 0 : index
      %c0_36 = arith.constant 0 : index
      %c0_37 = arith.constant 0 : index
      %32 = vector.load %arg7[%c0_35, %c0_36, %c0_37] : memref<4x2x128xf32, #tpu.memory_space<vmem>>, vector<4x2x128xf32>
      tpu.vector_store %arg7[%c0_35, %c0_36, %c0_37], %31 {strides = array<i32>} : memref<4x2x128xf32, #tpu.memory_space<vmem>>, vector<4x2x128xf32>,
      %cst_38 = arith.constant 0.000000e+00 : f32
      %33 = vector.broadcast %cst_38 : f32 to vector<4x2x128xf32>
      %c0_39 = arith.constant 0 : index
      %c0_40 = arith.constant 0 : index
      %c0_41 = arith.constant 0 : index
      %34 = vector.load %arg8[%c0_39, %c0_40, %c0_41] : memref<4x2x128xf32, #tpu.memory_space<vmem>>, vector<4x2x128xf32>
      tpu.vector_store %arg8[%c0_39, %c0_40, %c0_41], %33 {strides = array<i32>} : memref<4x2x128xf32, #tpu.memory_space<vmem>>, vector<4x2x128xf32>,
    } else {
    }
    %c0 = arith.constant 0 : index
    %c0_1 = arith.constant 0 : index
    %c0_2 = arith.constant 0 : index
    %c0_3 = arith.constant 0 : index
    %3 = vector.load %arg3[%c0, %c0_1, %c0_2, %c0_3] : memref<1x4x2x128xf32, #tpu.memory_space<vmem>>, vector<1x4x2x128xf32>
    %4 = vector.shape_cast %3 : vector<1x4x2x128xf32> to vector<4x2x128xf32>
    %c0_4 = arith.constant 0 : index
    %c0_5 = arith.constant 0 : index
    %c0_6 = arith.constant 0 : index
    %c0_7 = arith.constant 0 : index
    %5 = vector.load %arg4[%c0_4, %c0_5, %c0_6, %c0_7] : memref<1x1x2x128xi32, #tpu.memory_space<vmem>>, vector<1x1x2x128xi32>
    %6 = vector.shape_cast %5 : vector<1x1x2x128xi32> to vector<1x2x128xi32>
    %7 = tpu.iota {dimensions = array<i32: 0>} : vector<4x1x1xi32>
    %8 = vector.broadcast %6 : vector<1x2x128xi32> to vector<4x2x128xi32>
    %9 = vector.broadcast %7 : vector<4x1x1xi32> to vector<4x2x128xi32>
    %10 = arith.cmpi eq, %8, %9 : vector<4x2x128xi32>
    %cst = arith.constant 1.000000e+00 : f32
    %cst_8 = arith.constant 0.000000e+00 : f32
    %11 = vector.broadcast %cst : f32 to vector<4x2x128xf32>
    %12 = vector.broadcast %cst_8 : f32 to vector<4x2x128xf32>
    %13 = arith.select %10, %11, %12 : vector<4x2x128xi1>, vector<4x2x128xf32>
    %c0_9 = arith.constant 0 : index
    %c0_10 = arith.constant 0 : index
    %c0_11 = arith.constant 0 : index
    %14 = vector.load %arg6[%c0_9, %c0_10, %c0_11] : memref<4x2x128xf32, #tpu.memory_space<vmem>>, vector<4x2x128xf32>
    %cst_12 = arith.constant 0.000000e+00 : f32
    %15 = vector.broadcast %cst_12 : f32 to vector<4x2x128xf32>
    %16 = arith.select %10, %4, %15 : vector<4x2x128xi1>, vector<4x2x128xf32>
    %17 = arith.addf %14, %16 : vector<4x2x128xf32>
    %c0_13 = arith.constant 0 : index
    %c0_14 = arith.constant 0 : index
    %c0_15 = arith.constant 0 : index
    %18 = vector.load %arg6[%c0_13, %c0_14, %c0_15] : memref<4x2x128xf32, #tpu.memory_space<vmem>>, vector<4x2x128xf32>
    tpu.vector_store %arg6[%c0_13, %c0_14, %c0_15], %17 {strides = array<i32>} : memref<4x2x128xf32, #tpu.memory_space<vmem>>, vector<4x2x128xf32>,
    %c0_16 = arith.constant 0 : index
    %c0_17 = arith.constant 0 : index
    %c0_18 = arith.constant 0 : index
    %19 = vector.load %arg7[%c0_16, %c0_17, %c0_18] : memref<4x2x128xf32, #tpu.memory_space<vmem>>, vector<4x2x128xf32>
    %20 = arith.addf %19, %13 : vector<4x2x128xf32>
    %c0_19 = arith.constant 0 : index
    %c0_20 = arith.constant 0 : index
    %c0_21 = arith.constant 0 : index
    %21 = vector.load %arg7[%c0_19, %c0_20, %c0_21] : memref<4x2x128xf32, #tpu.memory_space<vmem>>, vector<4x2x128xf32>
    tpu.vector_store %arg7[%c0_19, %c0_20, %c0_21], %20 {strides = array<i32>} : memref<4x2x128xf32, #tpu.memory_space<vmem>>, vector<4x2x128xf32>,
    %c0_22 = arith.constant 0 : index
    %c0_23 = arith.constant 0 : index
    %c0_24 = arith.constant 0 : index
    %22 = vector.load %arg8[%c0_22, %c0_23, %c0_24] : memref<4x2x128xf32, #tpu.memory_space<vmem>>, vector<4x2x128xf32>
    %23 = arith.mulf %4, %4 : vector<4x2x128xf32>
    %24 = arith.addf %22, %23 : vector<4x2x128xf32>
    %c0_25 = arith.constant 0 : index
    %c0_26 = arith.constant 0 : index
    %c0_27 = arith.constant 0 : index
    %25 = vector.load %arg8[%c0_25, %c0_26, %c0_27] : memref<4x2x128xf32, #tpu.memory_space<vmem>>, vector<4x2x128xf32>
    tpu.vector_store %arg8[%c0_25, %c0_26, %c0_27], %24 {strides = array<i32>} : memref<4x2x128xf32, #tpu.memory_space<vmem>>, vector<4x2x128xf32>,
    %c0_i32_28 = arith.constant 0 : i32
    %26 = arith.cmpi eq, %arg2, %c0_i32_28 : i32
    %27 = arith.extui %26 : i1 to i32
    %c0_i32_29 = arith.constant 0 : i32
    %28 = arith.cmpi ne, %27, %c0_i32_29 : i32
    scf.if %28 {
      %c0_30 = arith.constant 0 : index
      %c0_31 = arith.constant 0 : index
      %c0_32 = arith.constant 0 : index
      %29 = vector.load %arg6[%c0_30, %c0_31, %c0_32] : memref<4x2x128xf32, #tpu.memory_space<vmem>>, vector<4x2x128xf32>
      %cst_33 = arith.constant dense<0.000000e+00> : vector<4x2xf32>
      %30 = vector.multi_reduction <add>, %29, %cst_33 [2] : vector<4x2x128xf32> to vector<4x2xf32>
      %cst_34 = arith.constant dense<0.000000e+00> : vector<4xf32>
      %31 = vector.multi_reduction <add>, %30, %cst_34 [1] : vector<4x2xf32> to vector<4xf32>
      %32 = vector.shape_cast %31 : vector<4xf32> to vector<4x1xf32>
      %c0_35 = arith.constant 0 : index
      %c0_36 = arith.constant 0 : index
      %c0_37 = arith.constant 0 : index
      %c0_38 = arith.constant 0 : index
      %33 = vector.load %arg5[%c0_35, %c0_36, %c0_37, %c0_38] : memref<1x1x4x3xf32, #tpu.memory_space<vmem>>, vector<1x1x4x1xf32>
      %34 = vector.shape_cast %33 : vector<1x1x4x1xf32> to vector<4x1xf32>
      %35 = vector.shape_cast %32 : vector<4x1xf32> to vector<1x1x4x1xf32>
      tpu.vector_store %arg5[%c0_35, %c0_36, %c0_37, %c0_38], %35 {strides = array<i32>} : memref<1x1x4x3xf32, #tpu.memory_space<vmem>>, vector<1x1x4x1xf32>,
      %c0_39 = arith.constant 0 : index
      %c0_40 = arith.constant 0 : index
      %c0_41 = arith.constant 0 : index
      %36 = vector.load %arg7[%c0_39, %c0_40, %c0_41] : memref<4x2x128xf32, #tpu.memory_space<vmem>>, vector<4x2x128xf32>
      %cst_42 = arith.constant dense<0.000000e+00> : vector<4x2xf32>
      %37 = vector.multi_reduction <add>, %36, %cst_42 [2] : vector<4x2x128xf32> to vector<4x2xf32>
      %cst_43 = arith.constant dense<0.000000e+00> : vector<4xf32>
      %38 = vector.multi_reduction <add>, %37, %cst_43 [1] : vector<4x2xf32> to vector<4xf32>
      %39 = vector.shape_cast %38 : vector<4xf32> to vector<4x1xf32>
      %c0_44 = arith.constant 0 : index
      %c0_45 = arith.constant 0 : index
      %c0_46 = arith.constant 0 : index
      %c1 = arith.constant 1 : index
      %40 = vector.load %arg5[%c0_44, %c0_45, %c0_46, %c1] : memref<1x1x4x3xf32, #tpu.memory_space<vmem>>, vector<1x1x4x1xf32>
      %41 = vector.shape_cast %40 : vector<1x1x4x1xf32> to vector<4x1xf32>
      %42 = vector.shape_cast %39 : vector<4x1xf32> to vector<1x1x4x1xf32>
      tpu.vector_store %arg5[%c0_44, %c0_45, %c0_46, %c1], %42 {strides = array<i32>} : memref<1x1x4x3xf32, #tpu.memory_space<vmem>>, vector<1x1x4x1xf32>,
      %c0_47 = arith.constant 0 : index
      %c0_48 = arith.constant 0 : index
      %c0_49 = arith.constant 0 : index
      %43 = vector.load %arg8[%c0_47, %c0_48, %c0_49] : memref<4x2x128xf32, #tpu.memory_space<vmem>>, vector<4x2x128xf32>
      %cst_50 = arith.constant dense<0.000000e+00> : vector<4x2xf32>
      %44 = vector.multi_reduction <add>, %43, %cst_50 [2] : vector<4x2x128xf32> to vector<4x2xf32>
      %cst_51 = arith.constant dense<0.000000e+00> : vector<4xf32>
      %45 = vector.multi_reduction <add>, %44, %cst_51 [1] : vector<4x2xf32> to vector<4xf32>
      %46 = vector.shape_cast %45 : vector<4xf32> to vector<4x1xf32>
      %c0_52 = arith.constant 0 : index
      %c0_53 = arith.constant 0 : index
      %c0_54 = arith.constant 0 : index
      %c2 = arith.constant 2 : index
      %47 = vector.load %arg5[%c0_52, %c0_53, %c0_54, %c2] : memref<1x1x4x3xf32, #tpu.memory_space<vmem>>, vector<1x1x4x1xf32>
      %48 = vector.shape_cast %47 : vector<1x1x4x1xf32> to vector<4x1xf32>
      %49 = vector.shape_cast %46 : vector<4x1xf32> to vector<1x1x4x1xf32>
      tpu.vector_store %arg5[%c0_52, %c0_53, %c0_54, %c2], %49 {strides = array<i32>} : memref<1x1x4x3xf32, #tpu.memory_space<vmem>>, vector<1x1x4x1xf32>,
    } else {
    }
    return
  }
  func.func @transform_0(%arg0: i32, %arg1: i32, %arg2: i32) -> (i32, i32, i32, i32) {
    %c1_i32 = arith.constant 1 : i32
    %0 = arith.muli %arg1, %c1_i32 : i32
    %1 = arith.addi %0, %arg2 : i32
    %c0_i32 = arith.constant 0 : i32
    %c0_i32_0 = arith.constant 0 : i32
    %c0_i32_1 = arith.constant 0 : i32
    return %arg0, %c0_i32, %1, %c0_i32_0 : i32, i32, i32, i32
  }
  func.func @transform_1(%arg0: i32, %arg1: i32, %arg2: i32) -> (i32, i32, i32, i32) {
    %c1_i32 = arith.constant 1 : i32
    %0 = arith.muli %arg1, %c1_i32 : i32
    %1 = arith.addi %0, %arg2 : i32
    %c0_i32 = arith.constant 0 : i32
    %c0_i32_0 = arith.constant 0 : i32
    %c0_i32_1 = arith.constant 0 : i32
    return %arg0, %c0_i32, %1, %c0_i32_0 : i32, i32, i32, i32
  }
  func.func @transform_2(%arg0: i32, %arg1: i32, %arg2: i32) -> (i32, i32, i32, i32) {
    %c0_i32 = arith.constant 0 : i32
    %c0_i32_0 = arith.constant 0 : i32
    %c0_i32_1 = arith.constant 0 : i32
    return %arg0, %arg1, %c0_i32, %c0_i32_0 : i32, i32, i32, i32
  }
}

</mosaic_0001>

<llo_original>
// kernel: tpu_custom_call.1
$region0: #{tpu_custom_call.1}
  #allocation0 [shape = 'u32[]', space=smem, size = 0x4, offset = 0x4, fixed_abs, tag = 'smem constant byte address 0x4 - core index']
  #allocation1 [shape = 'u32[144,128]{1,0:T(1,128)}', space=vmem, size = 0x12000, scoped, tag = 'internal scratch']
  #allocation2 [shape = 'f32[4,2,128]{2,1,0:T(2,128)}', space=vmem, size = 0x1000, scoped, tag = 'scratch operand']
  #allocation3 [shape = 'f32[4,2,128]{2,1,0:T(2,128)}', space=vmem, size = 0x1000, scoped, tag = 'scratch operand']
  #allocation4 [shape = 'f32[4,2,128]{2,1,0:T(2,128)}', space=vmem, size = 0x1000, scoped, tag = 'scratch operand']
  %s0 = inlined_call_operand.hbm [shape: f32[2,4,2,128], index: 0, kind: input, shape index: {}]
  %s1 = inlined_call_operand.hbm [shape: s32[2,1,2,128], index: 1, kind: input, shape index: {}]
  %s2 = inlined_call_operand.vmem [shape: f32[2,1,4,3], index: 2, kind: output, shape index: {}]
  %s3 = sld [smem:[#allocation0]]
  $region57: #{tpu_custom_call.1} parent=0
    _
  %s5 = ssub.s32 1, %s3
  %s6 = scalar_select 0, %s5, %s3
  $region1: #{tpu_custom_call.1} parent=0
    #allocation5 [shape = 'u8[8192]{0}', space=vmem, size = 0x2000, scoped, tag = 'input window, operand 0']
    #allocation6 [shape = 's32[2]{0}', space=sflag, size = 0x8, scoped, tag = 'scoped memory for tpu_custom_call.1']
    #allocation7 [shape = 'u8[2048]{0}', space=vmem, size = 0x800, scoped, tag = 'input window, operand 1']
    #allocation8 [shape = 's32[2]{0}', space=sflag, size = 0x8, scoped, tag = 'scoped memory for tpu_custom_call.1']
    %7 = vsyncpa [#allocation6], 0
    %s8 = scalar_lea.sflag [#allocation6], 1
    %9 = vsyncpa %s8, 0
    %10 = vsyncpa [#allocation8], 0
    %s11 = scalar_lea.sflag [#allocation8], 1
    %12 = vsyncpa %s11, 0
    loop: start=0, step=1, limit=4
    $region2: #{tpu_custom_call.1} parent=1 // loop_pre_header
      _
    $region3: #{tpu_custom_call.1} parent=1 // loop_header
      %s14 = sphi 0, %s18
      %p15 = scmp.ge.s32.totalorder %s14, 4
      %s21 = sphi 0, %s40
      %s22 = sphi 0, %s36
      %s23 = sphi 0, %s32
      %s24 = sphi 0, %s21
      %s25 = sphi 0, %s22
      %s26 = sphi 0, %s23
      %s27 = sphi 0, %s24
      %s28 = sphi 0, %s25
      %s29 = sphi 0, %s26
      %s47 = sphi 0, %s49
      %s50 = sphi 0, %s47
      %s51 = sphi 0, %s50
      %s67 = sphi 0, %s51
      %s77 = sphi 0, %s79
      %s80 = sphi 0, %s77
      %s81 = sphi 0, %s80
      %s97 = sphi 0, %s81
      %s105 = sphi 0, %s107
      %s108 = sphi 0, %s105
      %s109 = sphi 0, %s108
      %s125 = sphi 0, %s109
    $region4: #{tpu_custom_call.1} parent=1 // loop_header_branch
      %17 = sbr.rel (%p15) target = $region8
    $region5: #{tpu_custom_call.1} parent=1 // loop_body
      %s19 = ssub.s32 %s14, 1
      %s20 = ssub.s32 %s14, 2
      %s30 = sadd.s32 1, %s23
      %p31 = scmp.ge.s32.totalorder %s30, 1
      %s32 = scalar_select %p31, 0, %s30
      %s33 = sadd.s32 1, %s22
      %s34 = scalar_select %p31, %s33, %s22
      %p35 = scmp.ge.s32.totalorder %s34, 1
      %s36 = scalar_select %p35, 0, %s34
      %s37 = sadd.s32 1, %s21
      %s38 = scalar_select %p35, %s37, %s21
      %p39 = scmp.ge.s32.totalorder %s38, 2
      %s40 = scalar_select %p39, 0, %s38
      %s41 = sadd.s32 %s22, %s23
      %s42 = sadd.s32 %s36, %s32
      %s43 = ssub.s32 %s21, %s40
      %s44 = ssub.s32 %s41, %s42
      %s45 = sor.u32 %s43, %s44
      %p46 = scmp.eq.s32.totalorder %s45, 0
      %s48 = sadd.s32 %s47, 1
      %s49 = scalar_select %p46, %s47, %s48
      %p52 = pneg %p46
      %p53 = scmp.eq.s32.totalorder %s14, 1
      %p54 = por %p52, %p53
      %p55 = scmp.ne.s32.totalorder %s47, %s50
      %p56 = scmp.eq.s32.totalorder %s14, 0
      %p57 = por %p55, %p56
      %p58 = scmp.ne.s32.totalorder %s47, %s50
      %p59 = scmp.eq.s32.totalorder %s19, 1
      %p60 = por %p58, %p59
      %p61 = scmp.ne.s32.totalorder %s50, %s51
      %p62 = scmp.eq.s32.totalorder %s19, 0
      %p63 = por %p61, %p62
      %p64 = scmp.ne.s32.totalorder %s50, %s51
      %p65 = scmp.eq.s32.totalorder %s20, 1
      %p66 = por %p64, %p65
      %p68 = scmp.ne.s32.totalorder %s51, %s67
      %p69 = scmp.eq.s32.totalorder %s20, 0
      %p70 = por %p68, %p69
      %s71 = sadd.s32 %s22, %s23
      %s72 = sadd.s32 %s36, %s32
      %s73 = ssub.s32 %s21, %s40
      %s74 = ssub.s32 %s71, %s72
      %s75 = sor.u32 %s73, %s74
      %p76 = scmp.eq.s32.totalorder %s75, 0
      %s78 = sadd.s32 %s77, 1
      %s79 = scalar_select %p76, %s77, %s78
      %p82 = pneg %p76
      %p83 = scmp.eq.s32.totalorder %s14, 1
      %p84 = por %p82, %p83
      %p85 = scmp.ne.s32.totalorder %s77, %s80
      %p86 = scmp.eq.s32.totalorder %s14, 0
      %p87 = por %p85, %p86
      %p88 = scmp.ne.s32.totalorder %s77, %s80
      %p89 = scmp.eq.s32.totalorder %s19, 1
      %p90 = por %p88, %p89
      %p91 = scmp.ne.s32.totalorder %s80, %s81
      %p92 = scmp.eq.s32.totalorder %s19, 0
      %p93 = por %p91, %p92
      %p94 = scmp.ne.s32.totalorder %s80, %s81
      %p95 = scmp.eq.s32.totalorder %s20, 1
      %p96 = por %p94, %p95
      %p98 = scmp.ne.s32.totalorder %s81, %s97
      %p99 = scmp.eq.s32.totalorder %s20, 0
      %p100 = por %p98, %p99
      %s101 = ssub.s32 %s21, %s40
      %s102 = ssub.s32 %s22, %s36
      %s103 = sor.u32 %s101, %s102
      %p104 = scmp.eq.s32.totalorder %s103, 0
      %s106 = sadd.s32 %s105, 1
      %s107 = scalar_select %p104, %s105, %s106
      %p110 = pneg %p104
      %p111 = scmp.eq.s32.totalorder %s14, 1
      %p112 = por %p110, %p111
      %p113 = scmp.ne.s32.totalorder %s105, %s108
      %p114 = scmp.eq.s32.totalorder %s14, 0
      %p115 = por %p113, %p114
      %p116 = scmp.ne.s32.totalorder %s105, %s108
      %p117 = scmp.eq.s32.totalorder %s19, 1
      %p118 = por %p116, %p117
      %p119 = scmp.ne.s32.totalorder %s108, %s109
      %p120 = scmp.eq.s32.totalorder %s19, 0
      %p121 = por %p119, %p120
      %p122 = scmp.ne.s32.totalorder %s108, %s109
      %p123 = scmp.eq.s32.totalorder %s20, 1
      %p124 = por %p122, %p123
      %p126 = scmp.ne.s32.totalorder %s109, %s125
      %p127 = scmp.eq.s32.totalorder %s20, 0
      %p128 = por %p126, %p127
      %p129 = scmp.le.s32.totalorder 1, %s14
      %p130 = scmp.lt.s32.totalorder %s14, 3
      %p131 = pnand %p129, %p130
      %p132 = pneg %p131
      // Predicated region
      $region9: #{tpu_custom_call.1} parent=5 // pred_check
        _
      $region10: #{tpu_custom_call.1} parent=5 // pred_check_branch
        %134 = sbr.rel (%p131) target = $region12
      $region11: #{tpu_custom_call.1} parent=5 // pred_region
        %s135 = ssub.s32 %s14, 1
      $region12: #{tpu_custom_call.1} parent=5 // pred_fallthru
        _
      %p136 = scmp.lt.s32.totalorder %s14, 2
      // Predicated region
      $region13: #{tpu_custom_call.1} parent=5 // pred_check
        %p137 = pneg %p136
      $region14: #{tpu_custom_call.1} parent=5 // pred_check_branch
        %139 = sbr.rel (%p137) target = $region16
      $region15: #{tpu_custom_call.1} parent=5 // pred_region
        // Predicated region
        $region17: #{tpu_custom_call.1} parent=15 // pred_check
          %p140 = pneg %p57
        $region18: #{tpu_custom_call.1} parent=15 // pred_check_branch
          %142 = sbr.rel (%p140) target = $region20
        $region19: #{tpu_custom_call.1} parent=15 // pred_region
          %s143 = sand.u32 %s47, 1
          %s144 = scalar_lea.sflag [#allocation6], %s143
          %s145 = sand.u32 %s47, 1
          %s146 = smul.addr %s145, 8
          %s147 = scalar_lea.vmem [#allocation5], %s146
          %s148 = sadd.s32 %s22, %s23
          %s150 = ssub.s32 128, 128
          %151 = vsyncadd %s144, %s150
          %s152 = smul.addr %s21, 4
          %s153 = sadd.s32 %s148, %s152
          %s154 = smul.addr %s153, 32
          %s155 = scalar_lea.hbm %s0, %s154
          %s156 = sshll.u32 %s147, 4
          %s157 = int_to_ptr.vmem [resolvable:$true] %s156
          %162 = dma.hbm_to_vmem [thread:$0]  %s155, 128, %s157, %s144, 32, 32, 2
        $region20: #{tpu_custom_call.1} parent=15 // pred_fallthru
          _
        // Predicated region
        $region21: #{tpu_custom_call.1} parent=15 // pred_check
          %p163 = pneg %p87
        $region22: #{tpu_custom_call.1} parent=15 // pred_check_branch
          %165 = sbr.rel (%p163) target = $region24
        $region23: #{tpu_custom_call.1} parent=15 // pred_region
          %s166 = sand.u32 %s77, 1
          %s167 = scalar_lea.sflag [#allocation8], %s166
          %s168 = sand.u32 %s77, 1
          %s169 = smul.addr %s168, 2
          %s170 = scalar_lea.vmem [#allocation7], %s169
          %s171 = sadd.s32 %s22, %s23
          %s173 = ssub.s32 32, 32
          %174 = vsyncadd %s167, %s173
          %s175 = sadd.s32 %s171, %s21
          %s176 = smul.addr %s175, 32
          %s177 = scalar_lea.hbm %s1, %s176
          %s179 = sshll.u32 %s170, 4
          %s180 = int_to_ptr.vmem [resolvable:$true] %s179
          %182 = dma.hbm_to_vmem [thread:$0]  %s177, 32, %s180, %s167
        $region24: #{tpu_custom_call.1} parent=15 // pred_fallthru
          _
      $region16: #{tpu_custom_call.1} parent=5 // pred_fallthru
        _
      %p183 = scmp.le.s32.totalorder 1, %s14
      %p184 = scmp.lt.s32.totalorder %s14, 3
      %p185 = pnand %p183, %p184
      %p186 = pneg %p185
      // Predicated region
      $region25: #{tpu_custom_call.1} parent=5 // pred_check
        _
      $region26: #{tpu_custom_call.1} parent=5 // pred_check_branch
        %188 = sbr.rel (%p185) target = $region28
      $region27: #{tpu_custom_call.1} parent=5 // pred_region
        %s189 = ssub.s32 %s14, 1
        %s190 = sand.u32 %s50, 1
        %s191 = scalar_lea.sflag [#allocation6], %s190
        %s192 = sand.u32 %s50, 1
        %s193 = smul.addr %s192, 8
        %s194 = scalar_lea.vmem [#allocation5], %s193
        // Predicated region
        $region29: #{tpu_custom_call.1} parent=27 // pred_check
          %p195 = pneg %p63
        $region30: #{tpu_custom_call.1} parent=27 // pred_check_branch
          %197 = sbr.rel (%p195) target = $region32
        $region31: #{tpu_custom_call.1} parent=27 // pred_region
          %198 = dma.done %s191, 128
        $region32: #{tpu_custom_call.1} parent=27 // pred_fallthru
          _
        %s199 = sand.u32 %s80, 1
        %s200 = scalar_lea.sflag [#allocation8], %s199
        %s201 = sand.u32 %s80, 1
        %s202 = smul.addr %s201, 2
        %s203 = scalar_lea.vmem [#allocation7], %s202
        // Predicated region
        $region33: #{tpu_custom_call.1} parent=27 // pred_check
          %p204 = pneg %p93
        $region34: #{tpu_custom_call.1} parent=27 // pred_check_branch
          %206 = sbr.rel (%p204) target = $region36
        $region35: #{tpu_custom_call.1} parent=27 // pred_region
          %207 = dma.done %s200, 32
        $region36: #{tpu_custom_call.1} parent=27 // pred_fallthru
          _
        %s208 = sand.u32 %s50, 1
        %s209 = scalar_lea.sflag [#allocation6], %s208
        %s210 = sand.u32 %s50, 1
        %s211 = smul.addr %s210, 8
        %s212 = scalar_lea.vmem [#allocation5], %s211
        %p213 = pneg %p63
        %p214 = pneg %p60
        %s215 = sand.u32 %s80, 1
        %s216 = scalar_lea.sflag [#allocation8], %s215
        %s217 = sand.u32 %s80, 1
        %s218 = smul.addr %s217, 2
        %s219 = scalar_lea.vmem [#allocation7], %s218
        %p220 = pneg %p93
        %p221 = pneg %p90
        %p222 = pneg %p121
        %p223 = pneg %p118
        %p224 = scmp.lt.s32.totalorder %s24, 1
        %s225 = scalar_select %p224, %s24, 1
        %p226 = scmp.lt.s32.totalorder %s25, 0
        %s227 = scalar_select %p226, %s25, 0
        %s228 = sadd.s32 %s227, %s225
        %s229 = smul.addr %s228, 4
        %s230 = scalar_lea.vmem %s2, %s229
        %s231 = sadd.s32 %s25, %s26
        %s232 = sadd.s32 %s25, %s26
        %p233 = scmp.lt.s32.totalorder %s24, 1
        %s234 = scalar_select %p233, %s24, 1
        %p235 = scmp.lt.s32.totalorder %s25, 0
        %s236 = scalar_select %p235, %s25, 0
        %s237 = sadd.s32 %s236, %s234
        %s238 = smul.addr %s237, 4
        %s239 = scalar_lea.vmem %s2, %s238
        %p240 = scmp.eq.s32.totalorder %s26, 0
        // Predicated region
        $region37: #{tpu_custom_call.1} parent=27 // pred_check
          %p241 = pneg %p240
        $region38: #{tpu_custom_call.1} parent=27 // pred_check_branch
          %243 = sbr.rel (%p241) target = $region40
        $region39: #{tpu_custom_call.1} parent=27 // pred_region
          %244 = vst [vmem:[#allocation2] sm:$0x3] 0.0
          %245 = vst [vmem:[#allocation2 + $0x2] sm:$0x3] 0.0
          %246 = vst [vmem:[#allocation2 + $0x4] sm:$0x3] 0.0
          %247 = vst [vmem:[#allocation2 + $0x6] sm:$0x3] 0.0
          %248 = vst [vmem:[#allocation3] sm:$0x3] 0.0
          %249 = vst [vmem:[#allocation3 + $0x2] sm:$0x3] 0.0
          %250 = vst [vmem:[#allocation3 + $0x4] sm:$0x3] 0.0
          %251 = vst [vmem:[#allocation3 + $0x6] sm:$0x3] 0.0
          %252 = vst [vmem:[#allocation4] sm:$0x3] 0.0
          %253 = vst [vmem:[#allocation4 + $0x2] sm:$0x3] 0.0
          %254 = vst [vmem:[#allocation4 + $0x4] sm:$0x3] 0.0
          %255 = vst [vmem:[#allocation4 + $0x6] sm:$0x3] 0.0
        $region40: #{tpu_custom_call.1} parent=27 // pred_fallthru
          _
        %v256 = vld [vmem:[%s194] sm:$0x3]
        %v257 = vld [vmem:[%s194 + $0x2] sm:$0x3]
        %v258 = vld [vmem:[%s194 + $0x4] sm:$0x3]
        %v259 = vld [vmem:[%s194 + $0x6] sm:$0x3]
        %v260 = vld [vmem:[%s203] sm:$0x3]
        %vm261 = vcmp.eq.s32.totalorder %v260, 0
        %vm262 = vcmp.eq.s32.totalorder %v260, 1
        %vm263 = vcmp.eq.s32.totalorder %v260, 2
        %vm264 = vcmp.eq.s32.totalorder %v260, 3
        %v265 = vsel %vm261, 1.0, 0.0
        %v266 = vsel %vm262, 1.0, 0.0
        %v267 = vsel %vm263, 1.0, 0.0
        %v268 = vsel %vm264, 1.0, 0.0
        %v269 = vld [vmem:[#allocation2] sm:$0x3]
        %v270 = vld [vmem:[#allocation2 + $0x2] sm:$0x3]
        %v271 = vld [vmem:[#allocation2 + $0x4] sm:$0x3]
        %v272 = vld [vmem:[#allocation2 + $0x6] sm:$0x3]
        %v273 = vsel %vm261, %v256, 0.0
        %v274 = vsel %vm262, %v257, 0.0
        %v275 = vsel %vm263, %v258, 0.0
        %v276 = vsel %vm264, %v259, 0.0
        %v277 = vadd.f32 %v269, %v273
        %v278 = vadd.f32 %v270, %v274
        %v279 = vadd.f32 %v271, %v275
        %v280 = vadd.f32 %v272, %v276
        %281 = vst [vmem:[#allocation2] sm:$0x3] %v277
        %282 = vst [vmem:[#allocation2 + $0x2] sm:$0x3] %v278
        %283 = vst [vmem:[#allocation2 + $0x4] sm:$0x3] %v279
        %284 = vst [vmem:[#allocation2 + $0x6] sm:$0x3] %v280
        %v285 = vld [vmem:[#allocation3] sm:$0x3]
        %v286 = vld [vmem:[#allocation3 + $0x2] sm:$0x3]
        %v287 = vld [vmem:[#allocation3 + $0x4] sm:$0x3]
        %v288 = vld [vmem:[#allocation3 + $0x6] sm:$0x3]
        %v289 = vadd.f32 %v285, %v265
        %v290 = vadd.f32 %v286, %v266
        %v291 = vadd.f32 %v287, %v267
        %v292 = vadd.f32 %v288, %v268
        %293 = vst [vmem:[#allocation3] sm:$0x3] %v289
        %294 = vst [vmem:[#allocation3 + $0x2] sm:$0x3] %v290
        %295 = vst [vmem:[#allocation3 + $0x4] sm:$0x3] %v291
        %296 = vst [vmem:[#allocation3 + $0x6] sm:$0x3] %v292
        %v297 = vld [vmem:[#allocation4] sm:$0x3]
        %v298 = vld [vmem:[#allocation4 + $0x2] sm:$0x3]
        %v299 = vld [vmem:[#allocation4 + $0x4] sm:$0x3]
        %v300 = vld [vmem:[#allocation4 + $0x6] sm:$0x3]
        %v301 = vmul.f32 %v256, %v256
        %v302 = vmul.f32 %v257, %v257
        %v303 = vmul.f32 %v258, %v258
        %v304 = vmul.f32 %v259, %v259
        %v305 = vadd.f32 %v297, %v301
        %v306 = vadd.f32 %v298, %v302
        %v307 = vadd.f32 %v299, %v303
        %v308 = vadd.f32 %v300, %v304
        %309 = vst [vmem:[#allocation4] sm:$0x3] %v305
        %310 = vst [vmem:[#allocation4 + $0x2] sm:$0x3] %v306
        %311 = vst [vmem:[#allocation4 + $0x4] sm:$0x3] %v307
        %312 = vst [vmem:[#allocation4 + $0x6] sm:$0x3] %v308
        // Predicated region
        $region41: #{tpu_custom_call.1} parent=27 // pred_check
          %p313 = pneg %p240
        $region42: #{tpu_custom_call.1} parent=27 // pred_check_branch
          %315 = sbr.rel (%p313) target = $region44
        $region43: #{tpu_custom_call.1} parent=27 // pred_region
          %v316 = vld [vmem:[#allocation2] sm:$0x3]
          %v317 = vld [vmem:[#allocation2 + $0x2] sm:$0x3]
          %v318 = vld [vmem:[#allocation2 + $0x4] sm:$0x3]
          %v319 = vld [vmem:[#allocation2 + $0x6] sm:$0x3]
          %vm320 = vcmask 1041408
          %v321 = vsel %vm320, %v316, 0.0
          %322 = vadd.xlane.f32.xlu0 %v321
          %v323 = vpop.xlane.xlu0 %322
          %v324 = vsel %vm320, %v317, 0.0
          %325 = vadd.xlane.f32.xlu0 %v324
          %v326 = vpop.xlane.xlu0 %325
          %v327 = vsel %vm320, %v318, 0.0
          %328 = vadd.xlane.f32.xlu0 %v327
          %v329 = vpop.xlane.xlu0 %328
          %v330 = vsel %vm320, %v319, 0.0
          %331 = vadd.xlane.f32.xlu0 %v330
          %v332 = vpop.xlane.xlu0 %331
          %v337 = vlaneseq
          %v338 = vand.u32 %v337, 127
          %v339 = vlaneseq
          %v340 = vshrl.u32 %v339, 7
          %v341 = vsub.s32 %v338, %v340
          %v342 = vrot.slane %v323, %v341
          %v343 = vlaneseq
          %v344 = vshrl.u32 %v343, 7
          %v345 = vsub.s32 %v338, %v344
          %v346 = vrot.slane %v326, %v345
          %v347 = vlaneseq
          %v348 = vshrl.u32 %v347, 7
          %v349 = vsub.s32 %v338, %v348
          %v350 = vrot.slane %v329, %v349
          %v351 = vlaneseq
          %v352 = vshrl.u32 %v351, 7
          %v353 = vsub.s32 %v338, %v352
          %v354 = vrot.slane %v332, %v353
          %vm355 = vcmask 1041409
          %v356 = vsel %vm355, %v346, %v342
          %vm357 = vcmask 1042434
          %v358 = vsel %vm357, %v350, %v356
          %vm359 = vcmask 1043459
          %v360 = vsel %vm359, %v354, %v358
          %vm362 = vcmask 11264
          %v363 = vsel %vm362, %v360, 0.0
          %364 = vadd.xlane.f32.xlu0 %v363
          %v365 = vpop.xlane.xlu0 %364
          %vm366 = vcmask 3072
          %367 = vst.msk [vmem:[%s239] sm:$0xf] %vm366, %v365
          %v368 = vld [vmem:[#allocation3] sm:$0x3]
          %v369 = vld [vmem:[#allocation3 + $0x2] sm:$0x3]
          %v370 = vld [vmem:[#allocation3 + $0x4] sm:$0x3]
          %v371 = vld [vmem:[#allocation3 + $0x6] sm:$0x3]
          %v372 = vsel %vm320, %v368, 0.0
          %373 = vadd.xlane.f32.xlu0 %v372
          %v374 = vpop.xlane.xlu0 %373
          %v375 = vsel %vm320, %v369, 0.0
          %376 = vadd.xlane.f32.xlu0 %v375
          %v377 = vpop.xlane.xlu0 %376
          %v378 = vsel %vm320, %v370, 0.0
          %379 = vadd.xlane.f32.xlu0 %v378
          %v380 = vpop.xlane.xlu0 %379
          %v381 = vsel %vm320, %v371, 0.0
          %382 = vadd.xlane.f32.xlu0 %v381
          %v383 = vpop.xlane.xlu0 %382
          %v388 = vlaneseq
          %v389 = vshrl.u32 %v388, 7
          %v390 = vsub.s32 %v338, %v389
          %v391 = vrot.slane %v374, %v390
          %v392 = vlaneseq
          %v393 = vshrl.u32 %v392, 7
          %v394 = vsub.s32 %v338, %v393
          %v395 = vrot.slane %v377, %v394
          %v396 = vlaneseq
          %v397 = vshrl.u32 %v396, 7
          %v398 = vsub.s32 %v338, %v397
          %v399 = vrot.slane %v380, %v398
          %v400 = vlaneseq
          %v401 = vshrl.u32 %v400, 7
          %v402 = vsub.s32 %v338, %v401
          %v403 = vrot.slane %v383, %v402
          %v404 = vsel %vm355, %v395, %v391
          %v405 = vsel %vm357, %v399, %v404
          %v406 = vsel %vm359, %v403, %v405
          %v408 = vsel %vm362, %v406, 0.0
          %409 = vadd.xlane.f32.xlu0 %v408
          %v410 = vpop.xlane.xlu0 %409
          %vm411 = vcmask 11272
          %412 = vst.msk [vmem:[%s239] sm:$0xf] %vm411, %v410
          %v413 = vld [vmem:[#allocation4] sm:$0x3]
          %v414 = vld [vmem:[#allocation4 + $0x2] sm:$0x3]
          %v415 = vld [vmem:[#allocation4 + $0x4] sm:$0x3]
          %v416 = vld [vmem:[#allocation4 + $0x6] sm:$0x3]
          %v417 = vsel %vm320, %v413, 0.0
          %418 = vadd.xlane.f32.xlu0 %v417
          %v419 = vpop.xlane.xlu0 %418
          %v420 = vsel %vm320, %v414, 0.0
          %421 = vadd.xlane.f32.xlu0 %v420
          %v422 = vpop.xlane.xlu0 %421
          %v423 = vsel %vm320, %v415, 0.0
          %424 = vadd.xlane.f32.xlu0 %v423
          %v425 = vpop.xlane.xlu0 %424
          %v426 = vsel %vm320, %v416, 0.0
          %427 = vadd.xlane.f32.xlu0 %v426
          %v428 = vpop.xlane.xlu0 %427
          %v433 = vlaneseq
          %v434 = vshrl.u32 %v433, 7
          %v435 = vsub.s32 %v338, %v434
          %v436 = vrot.slane %v419, %v435
          %v437 = vlaneseq
          %v438 = vshrl.u32 %v437, 7
          %v439 = vsub.s32 %v338, %v438
          %v440 = vrot.slane %v422, %v439
          %v441 = vlaneseq
          %v442 = vshrl.u32 %v441, 7
          %v443 = vsub.s32 %v338, %v442
          %v444 = vrot.slane %v425, %v443
          %v445 = vlaneseq
          %v446 = vshrl.u32 %v445, 7
          %v447 = vsub.s32 %v338, %v446
          %v448 = vrot.slane %v428, %v447
          %v449 = vsel %vm355, %v440, %v436
          %v450 = vsel %vm357, %v444, %v449
          %v451 = vsel %vm359, %v448, %v450
          %v453 = vsel %vm362, %v451, 0.0
          %454 = vadd.xlane.f32.xlu0 %v453
          %v455 = vpop.xlane.xlu0 %454
          %vm456 = vcmask 19472
          %457 = vst.msk [vmem:[%s239] sm:$0xf] %vm456, %v455
        $region44: #{tpu_custom_call.1} parent=27 // pred_fallthru
          _
        %p458 = scmp.lt.s32.totalorder %s24, 1
        %s459 = scalar_select %p458, %s24, 1
        %p460 = scmp.lt.s32.totalorder %s25, 0
        %s461 = scalar_select %p460, %s25, 0
        %s462 = sadd.s32 %s461, %s459
        %s463 = smul.addr %s462, 4
        %s464 = scalar_lea.vmem %s2, %s463
        // Predicated region
        $region45: #{tpu_custom_call.1} parent=27 // pred_check
          %p465 = pneg %p118
        $region46: #{tpu_custom_call.1} parent=27 // pred_check_branch
          %467 = sbr.rel (%p465) target = $region48
        $region47: #{tpu_custom_call.1} parent=27 // pred_region
          _
        $region48: #{tpu_custom_call.1} parent=27 // pred_fallthru
          _
      $region28: #{tpu_custom_call.1} parent=5 // pred_fallthru
        _
      %p468 = scmp.le.s32.totalorder 2, %s14
      // Predicated region
      $region49: #{tpu_custom_call.1} parent=5 // pred_check
        %p469 = pneg %p468
      $region50: #{tpu_custom_call.1} parent=5 // pred_check_branch
        %471 = sbr.rel (%p469) target = $region52
      $region51: #{tpu_custom_call.1} parent=5 // pred_region
        %s472 = ssub.s32 %s14, 2
        // Predicated region
        $region53: #{tpu_custom_call.1} parent=51 // pred_check
          %p473 = pneg %p124
        $region54: #{tpu_custom_call.1} parent=51 // pred_check_branch
          %475 = sbr.rel (%p473) target = $region56
        $region55: #{tpu_custom_call.1} parent=51 // pred_region
          %p476 = scmp.lt.s32.totalorder %s27, 1
          %s477 = scalar_select %p476, %s27, 1
          %p478 = scmp.lt.s32.totalorder %s28, 0
          %s479 = scalar_select %p478, %s28, 0
          %s480 = sadd.s32 %s479, %s477
          %s481 = smul.addr %s480, 4
          %s482 = scalar_lea.vmem %s2, %s481
        $region56: #{tpu_custom_call.1} parent=51 // pred_fallthru
          _
      $region52: #{tpu_custom_call.1} parent=5 // pred_fallthru
        _
    $region6: #{tpu_custom_call.1} parent=1 // loop_footer
      %s18 = sadd.s32 1, %s14
    $region7: #{tpu_custom_call.1} parent=1 // loop_footer_branch
      %13 = sbr.rel target = $region3
    $region8: #{tpu_custom_call.1} parent=1 // loop_exit
      _
    %483 = vsyncpa [#allocation6], 1
    %s484 = scalar_lea.sflag [#allocation6], 1
    %485 = vsyncpa %s484, 1
    %486 = vsyncpa [#allocation8], 1
    %s487 = scalar_lea.sflag [#allocation8], 1
    %488 = vsyncpa %s487, 1

</llo_original>
